<compile_context>
chip_gen: v5e
topology: v5e:2x2
jax: 0.10.0
libtpu: 0.0.40
codegen_flags: <defaults>
</compile_context>

<pallas_src>
import jax
import jax.numpy as jnp
from jax.experimental import pallas as pl
from jax.experimental.pallas import tpu as pltpu

HIDDEN = 160               # fixed by the module (1 <= h <= 256)
H_PAD = 256                # hidden padded to a lane-dense multiple of 128
LANE = 128
TM_ALIGN = 16              # bf16 native sublane packing
TM_MAX = 1024              # batch tile cap
MEGACORE_MIN_ROWS = 512    # force >=2 grid steps past this (v7x: 2 TensorCores)
X_STREAM_VMEM_BUDGET = 12 << 20   # budget for streamed x buffers + hidden scratch


def _round_up(x, m):
    return (x + m - 1) // m * m


def _choose_tm(n, in_size):
    """Pick the batch tile.

    * VMEM-driven cap (streamed x double-buffer f32 + in-kernel bf16 cast +
      f32/bf16 hidden scratch), never above TM_MAX.
    * Balanced across tiles so an unlucky n doesn't waste most of the last tile.
    * >= 2 tiles for large batches so v7x can shard across both TensorCores.
    * If a single tile suffices, use tm == n (full-dim block: always legal,
      zero padding); otherwise round to a multiple of 16 (bf16 sublane pack).
    """
    per_row_bytes = in_size * (2 * 4 + 2) + H_PAD * (4 + 2)
    vmem_cap = max((X_STREAM_VMEM_BUDGET // per_row_bytes) // TM_ALIGN * TM_ALIGN,
                   TM_ALIGN)
    tm_max = min(TM_MAX, vmem_cap)
    n_tiles = pl.cdiv(n, tm_max)
    if n >= MEGACORE_MIN_ROWS:
        n_tiles = max(n_tiles, 2)
    if n_tiles == 1:
        return n
    return min(_round_up(pl.cdiv(n, n_tiles), TM_ALIGN), tm_max)


def _mlp_kernel(x_ref, w1_ref, b1_ref, w2_ref, b2_ref, o_ref):
    """out = relu(x @ w1 + b1) @ w2 + b2 for one batch tile.

    x arrives f32 straight from HBM and is cast to bf16 in-register (full-rate
    MXU); accumulation and biases are f32.  Grid rows are independent, so any
    garbage rows in a partial last block only produce garbage output rows,
    which Pallas drops on the out-of-bounds store.
    """
    x = x_ref[...].astype(jnp.bfloat16)
    h = jnp.dot(x, w1_ref[...], preferred_element_type=jnp.float32)
    h = jnp.maximum(h + b1_ref[...], 0.0)                       # bias + ReLU (VPU)
    y = jnp.dot(h.astype(w2_ref.dtype), w2_ref[...],
                preferred_element_type=jnp.float32)
    out_size = o_ref.shape[-1]
    o_ref[...] = y[:, :out_size] + b2_ref[...]


def prepare_params(w1, b1, w2, b2):
    """One-time weight prep (call once, outside the per-step forward).

    Takes PyTorch-layout params:
      w1: (160, in_size), b1: (160,), w2: (out_size, 160), b2: (out_size,)
    Returns transposed bf16 weights (K kept at exact in_size; hidden padded to
    256; fc2 output padded to a lane-dense multiple of 128) + f32 bias rows.
    """
    in_size = w1.shape[1]
    out_size = w2.shape[0]
    out_pad = _round_up(out_size, LANE)

    w1_t = jnp.zeros((in_size, H_PAD), jnp.float32).at[:, :HIDDEN].set(w1.T)
    w2_t = jnp.zeros((H_PAD, out_pad), jnp.float32).at[:HIDDEN, :out_size].set(w2.T)
    b1_r = jnp.zeros((1, H_PAD), jnp.float32).at[0, :HIDDEN].set(b1)
    b2_r = b2.reshape(1, out_size).astype(jnp.float32)

    return {
        "w1_t": w1_t.astype(jnp.bfloat16),
        "b1_r": b1_r,
        "w2_t": w2_t.astype(jnp.bfloat16),
        "b2_r": b2_r,
        "in_size": in_size,
        "out_size": out_size,
    }


def neuralnet_forward(x, params):
    """Forward pass: x (N, in_size) f32 -> (N, out_size) f32 (no host pre-pass)."""
    w1_t, b1_r = params["w1_t"], params["b1_r"]
    w2_t, b2_r = params["w2_t"], params["b2_r"]
    in_size, out_size = params["in_size"], params["out_size"]
    assert x.shape[1] == in_size

    n = x.shape[0]
    h_pad = w1_t.shape[1]
    out_pad = w2_t.shape[1]

    tm = _choose_tm(n, in_size)
    grid = (pl.cdiv(n, tm),)

    # Explicit VMEM budget (v7x: 64 MiB physical / 32 MiB scoped default).
    vmem_bytes = (
        2 * tm * in_size * 4                             # x: double-buffered f32 stream
        + tm * in_size * 2                               # in-kernel bf16 cast of x
        + tm * h_pad * (4 + 2)                           # h scratch: f32 acc + bf16 cast
        + 2 * tm * out_size * 4                          # y: double-buffered stream
        + 2 * (in_size * h_pad + h_pad * out_pad) * 2    # resident bf16 weights
        + 2 * (h_pad + out_size) * 4                     # resident biases
    )
    vmem_limit = max(min(int(vmem_bytes * 1.5) + (8 << 20), 48 << 20), 16 << 20)

    flops = 2 * n * (in_size * h_pad + h_pad * out_pad)
    bytes_accessed = (n * in_size * 4 + w1_t.size * 2 + w2_t.size * 2
                      + b1_r.size * 4 + b2_r.size * 4 + n * out_size * 4)

    return pl.pallas_call(
        _mlp_kernel,
        out_shape=jax.ShapeDtypeStruct((n, out_size), jnp.float32),
        grid=grid,
        in_specs=[
            # x: batch-streamed; last dim == full array dim so no K padding and
            # no host-side copy.  (If the per-step x DMA ever shows up exposed
            # at small in_size, add pipeline_mode=pl.Buffered(3) here only.)
            pl.BlockSpec((tm, in_size), lambda i: (i, 0)),
            pl.BlockSpec((in_size, h_pad), lambda i: (0, 0)),   # w1: resident
            pl.BlockSpec((1, h_pad), lambda i: (0, 0)),         # b1: resident
            pl.BlockSpec((h_pad, out_pad), lambda i: (0, 0)),   # w2: resident
            pl.BlockSpec((1, out_size), lambda i: (0, 0)),      # b2: resident
        ],
        out_specs=pl.BlockSpec((tm, out_size), lambda i: (i, 0)),
        compiler_params=pltpu.CompilerParams(
            dimension_semantics=("parallel",),
            vmem_limit_bytes=vmem_limit),
        cost_estimate=pl.CostEstimate(
            flops=flops, transcendentals=0, bytes_accessed=bytes_accessed),
    )(x, w1_t, b1_r, w2_t, b2_r)


def init_params(key, in_size, out_size):
    """Deterministic init matching PyTorch nn.Linear default U(-1/sqrt(fan_in), +)."""
    k1, k2, k3, k4 = jax.random.split(key, 4)
    bound1 = 1.0 / jnp.sqrt(in_size)
    bound2 = 1.0 / jnp.sqrt(HIDDEN)
    w1 = jax.random.uniform(k1, (HIDDEN, in_size), jnp.float32, -bound1, bound1)
    b1 = jax.random.uniform(k2, (HIDDEN,), jnp.float32, -bound1, bound1)
    w2 = jax.random.uniform(k3, (out_size, HIDDEN), jnp.float32, -bound2, bound2)
    b2 = jax.random.uniform(k4, (out_size,), jnp.float32, -bound2, bound2)
    return w1, b1, w2, b2


if __name__ == "__main__":
    key = jax.random.PRNGKey(0)
    k_x, k_p, k_x2 = jax.random.split(key, 3)

    # Small shapes consistent with the module: (N, in_size) -> (N, out_size).
    # in_size deliberately not a multiple of 128 (no-K-padding path).
    N, IN_SIZE, OUT_SIZE = 8, 200, 4
    x = jax.random.normal(k_x, (N, IN_SIZE), jnp.float32)
    w1, b1, w2, b2 = init_params(k_p, IN_SIZE, OUT_SIZE)
    params = prepare_params(w1, b1, w2, b2)          # one-time prep (hoisted)

    def reference(xx):
        # Matches the kernel's bf16-input / f32-accumulate precision.
        xb = xx.astype(jnp.bfloat16).astype(jnp.float32)
        w1b = w1.astype(jnp.bfloat16).astype(jnp.float32)
        w2b = w2.astype(jnp.bfloat16).astype(jnp.float32)
        h = jnp.maximum(xb @ w1b.T + b1, 0.0)
        return h.astype(jnp.bfloat16).astype(jnp.float32) @ w2b.T + b2

    y = jax.block_until_ready(neuralnet_forward(x, params))
    assert y.shape == (N, OUT_SIZE)
    assert jnp.allclose(y, reference(x), atol=1e-2, rtol=1e-2)

    # Multi-tile path: 2 grid steps (v7x megacore sharding, resident weights).
    N2 = 608
    x2 = jax.random.normal(k_x2, (N2, IN_SIZE), jnp.float32)
    y2 = jax.block_until_ready(neuralnet_forward(x2, params))
    assert y2.shape == (N2, OUT_SIZE)
    assert jnp.allclose(y2, reference(x2), atol=1e-2, rtol=1e-2)

    print("KERNEL_OK")
</pallas_src>

<mosaic_0001>
module attributes {stable_mosaic.version = 11 : i64} {
  func.func @_mlp_kernel(%arg0: i32, %arg1: memref<8x200xf32, #tpu.memory_space<vmem>>, %arg2: memref<200x256xbf16, #tpu.memory_space<vmem>>, %arg3: memref<1x256xf32, #tpu.memory_space<vmem>>, %arg4: memref<256x128xbf16, #tpu.memory_space<vmem>>, %arg5: memref<1x4xf32, #tpu.memory_space<vmem>>, %arg6: memref<8x4xf32, #tpu.memory_space<vmem>>) attributes {dimension_semantics = [#tpu.dimension_semantics<parallel>], iteration_bounds = array<i64: 1>, scalar_prefetch = 0 : i64, scratch_operands = 0 : i64, tpu.core_type = #tpu.core_type<tc>, window_params = [{transform_indices = @transform_0, window_bounds = array<i64: 8, 200>}, {pipeline_mode = #tpu.pipeline_mode<synchronous>, transform_indices = @transform_1, window_bounds = array<i64: 200, 256>}, {pipeline_mode = #tpu.pipeline_mode<synchronous>, transform_indices = @transform_2, window_bounds = array<i64: 1, 256>}, {pipeline_mode = #tpu.pipeline_mode<synchronous>, transform_indices = @transform_3, window_bounds = array<i64: 256, 128>}, {pipeline_mode = #tpu.pipeline_mode<synchronous>, transform_indices = @transform_4, window_bounds = array<i64: 1, 4>}, {transform_indices = @transform_5, window_bounds = array<i64: 8, 4>}]} {
    %c0 = arith.constant 0 : index
    %c0_0 = arith.constant 0 : index
    %0 = vector.load %arg1[%c0, %c0_0] : memref<8x200xf32, #tpu.memory_space<vmem>>, vector<8x200xf32>
    %1 = arith.truncf %0 : vector<8x200xf32> to vector<8x200xbf16>
    %c0_1 = arith.constant 0 : index
    %c0_2 = arith.constant 0 : index
    %2 = vector.load %arg2[%c0_1, %c0_2] : memref<200x256xbf16, #tpu.memory_space<vmem>>, vector<200x256xbf16>
    %cst = arith.constant dense<0.000000e+00> : vector<8x256xf32>
    %3 = tpu.matmul %1, %2, %cst {dimension_numbers = #tpu.dot_dimension_numbers<[1], [0], [0], [1], [0, 0, 1, 1], [], []>} : vector<8x200xbf16>, vector<200x256xbf16>, vector<8x256xf32> -> vector<8x256xf32>
    %c0_3 = arith.constant 0 : index
    %c0_4 = arith.constant 0 : index
    %4 = vector.load %arg3[%c0_3, %c0_4] : memref<1x256xf32, #tpu.memory_space<vmem>>, vector<1x256xf32>
    %5 = vector.broadcast %4 : vector<1x256xf32> to vector<8x256xf32>
    %6 = arith.addf %3, %5 : vector<8x256xf32>
    %cst_5 = arith.constant 0.000000e+00 : f32
    %7 = vector.broadcast %cst_5 : f32 to vector<8x256xf32>
    %8 = arith.maximumf %6, %7 : vector<8x256xf32>
    %9 = arith.truncf %8 : vector<8x256xf32> to vector<8x256xbf16>
    %c0_6 = arith.constant 0 : index
    %c0_7 = arith.constant 0 : index
    %10 = vector.load %arg4[%c0_6, %c0_7] : memref<256x128xbf16, #tpu.memory_space<vmem>>, vector<256x128xbf16>
    %cst_8 = arith.constant dense<0.000000e+00> : vector<8x128xf32>
    %11 = tpu.matmul %9, %10, %cst_8 {dimension_numbers = #tpu.dot_dimension_numbers<[1], [0], [0], [1], [0, 0, 1, 1], [], []>} : vector<8x256xbf16>, vector<256x128xbf16>, vector<8x128xf32> -> vector<8x128xf32>
    %12 = vector.extract_strided_slice %11 {offsets = [0, 0], sizes = [8, 4], strides = [1, 1]} : vector<8x128xf32> to vector<8x4xf32>
    %c0_9 = arith.constant 0 : index
    %c0_10 = arith.constant 0 : index
    %13 = vector.load %arg5[%c0_9, %c0_10] : memref<1x4xf32, #tpu.memory_space<vmem>>, vector<1x4xf32>
    %14 = vector.broadcast %13 : vector<1x4xf32> to vector<8x4xf32>
    %15 = arith.addf %12, %14 : vector<8x4xf32>
    %c0_11 = arith.constant 0 : index
    %c0_12 = arith.constant 0 : index
    %16 = vector.load %arg6[%c0_11, %c0_12] : memref<8x4xf32, #tpu.memory_space<vmem>>, vector<8x4xf32>
    tpu.vector_store %arg6[%c0_11, %c0_12], %15 {strides = array<i32>} : memref<8x4xf32, #tpu.memory_space<vmem>>, vector<8x4xf32>,
    return
  }
  func.func @transform_0(%arg0: i32) -> (i32, i32) {
    %c0_i32 = arith.constant 0 : i32
    %c0_i32_0 = arith.constant 0 : i32
    return %arg0, %c0_i32 : i32, i32
  }
  func.func @transform_1(%arg0: i32) -> (i32, i32) {
    %c0_i32 = arith.constant 0 : i32
    %c0_i32_0 = arith.constant 0 : i32
    %c0_i32_1 = arith.constant 0 : i32
    return %c0_i32, %c0_i32_0 : i32, i32
  }
  func.func @transform_2(%arg0: i32) -> (i32, i32) {
    %c0_i32 = arith.constant 0 : i32
    %c0_i32_0 = arith.constant 0 : i32
    %c0_i32_1 = arith.constant 0 : i32
    return %c0_i32, %c0_i32_0 : i32, i32
  }
  func.func @transform_3(%arg0: i32) -> (i32, i32) {
    %c0_i32 = arith.constant 0 : i32
    %c0_i32_0 = arith.constant 0 : i32
    %c0_i32_1 = arith.constant 0 : i32
    return %c0_i32, %c0_i32_0 : i32, i32
  }
  func.func @transform_4(%arg0: i32) -> (i32, i32) {
    %c0_i32 = arith.constant 0 : i32
    %c0_i32_0 = arith.constant 0 : i32
    %c0_i32_1 = arith.constant 0 : i32
    return %c0_i32, %c0_i32_0 : i32, i32
  }
  func.func @transform_5(%arg0: i32) -> (i32, i32) {
    %c0_i32 = arith.constant 0 : i32
    %c0_i32_0 = arith.constant 0 : i32
    return %arg0, %c0_i32 : i32, i32
  }
}

</mosaic_0001>

<llo_original>
// kernel: tpu_custom_call.1
$region0: #{tpu_custom_call.1}
  #allocation0 [shape = 'u32[]', space=smem, size = 0x4, offset = 0x4, fixed_abs, tag = 'smem constant byte address 0x4 - core index']
  #allocation1 [shape = 'u32[72,128]{1,0:T(1,128)}', space=vmem, size = 0x9000, scoped, tag = 'internal scratch']
  %s0 = inlined_call_operand.hbm [shape: f32[8,200], index: 0, kind: input, shape index: {}]
  %s1 = inlined_call_operand.hbm [shape: bf16[200,256], index: 1, kind: input, shape index: {}]
  %s2 = inlined_call_operand.hbm [shape: f32[1,256], index: 2, kind: input, shape index: {}]
  %s3 = inlined_call_operand.hbm [shape: bf16[256,128], index: 3, kind: input, shape index: {}]
  %s4 = inlined_call_operand.vmem [shape: f32[1,4], index: 4, kind: input, shape index: {}]
  %s5 = inlined_call_operand.vmem [shape: f32[8,4], index: 5, kind: output, shape index: {}]
  %s6 = sld [smem:[#allocation0]]
  $region46: #{tpu_custom_call.1} parent=0
    _
  %s8 = ssub.s32 1, %s6
  %s9 = scalar_select 0, %s8, %s6
  $region1: #{tpu_custom_call.1} parent=0
    #allocation2 [shape = 'u8[8192]{0}', space=vmem, size = 0x2000, scoped, tag = 'input window, operand 0, single buffered']
    #allocation3 [shape = 's32[1]{0}', space=sflag, size = 0x4, scoped, tag = 'scoped memory for tpu_custom_call.1']
    #allocation4 [shape = 'u8[102400]{0}', space=vmem, size = 0x19000, scoped, tag = 'input window, operand 1, single buffered']
    #allocation5 [shape = 's32[1]{0}', space=sflag, size = 0x4, scoped, tag = 'scoped memory for tpu_custom_call.1']
    #allocation6 [shape = 'u8[1024]{0}', space=vmem, size = 0x400, scoped, tag = 'input window, operand 2, single buffered']
    #allocation7 [shape = 'u8[65536]{0}', space=vmem, size = 0x10000, scoped, tag = 'input window, operand 3, single buffered']
    #allocation8 [shape = 's32[1]{0}', space=sflag, size = 0x4, scoped, tag = 'scoped memory for tpu_custom_call.1']
    %10 = vsyncpa [#allocation3], 0
    %11 = vsyncpa [#allocation5], 0
    %12 = vsyncpa [#allocation8], 0
    // Predicated region
    $region2: #{tpu_custom_call.1} parent=1 // pred_check
      _
    $region3: #{tpu_custom_call.1} parent=1 // pred_check_branch
      %14 = sbr.rel (0) target = $region5
    $region4: #{tpu_custom_call.1} parent=1 // pred_region
      %16 = vsyncadd [#allocation3], 0
      %s18 = sshll.u32 %s0, 4
      %s19 = int_to_ptr.hbm [resolvable:$true] %s18
      %s20 = sshll.u32 [#allocation2], 4
      %s21 = int_to_ptr.vmem [resolvable:$true] %s20
      %23 = dma.hbm_to_vmem [thread:$0]  %s19, 256, %s21, [#allocation3]
    $region5: #{tpu_custom_call.1} parent=1 // pred_fallthru
      _
    // Predicated region
    $region6: #{tpu_custom_call.1} parent=1 // pred_check
      _
    $region7: #{tpu_custom_call.1} parent=1 // pred_check_branch
      %25 = sbr.rel (0) target = $region9
    $region8: #{tpu_custom_call.1} parent=1 // pred_region
      %27 = vsyncadd [#allocation5], 0
      %s28 = sshll.u32 %s1, 4
      %s29 = int_to_ptr.hbm [resolvable:$true] %s28
      %s30 = sshll.u32 [#allocation4], 4
      %s31 = int_to_ptr.vmem [resolvable:$true] %s30
      %36 = dma.hbm_to_vmem [thread:$0]  %s29, 3200, %s31, [#allocation5], 128, 128, 8
    $region9: #{tpu_custom_call.1} parent=1 // pred_fallthru
      _
    // Predicated region
    $region10: #{tpu_custom_call.1} parent=1 // pred_check
      _
    $region11: #{tpu_custom_call.1} parent=1 // pred_check_branch
      %38 = sbr.rel (0) target = $region13
    $region12: #{tpu_custom_call.1} parent=1 // pred_region
      %40 = vsyncadd [#allocation5], 0
      %s42 = sshll.u32 %s2, 4
      %s43 = int_to_ptr.hbm [resolvable:$true] %s42
      %s44 = sshll.u32 [#allocation6], 4
      %s45 = int_to_ptr.vmem [resolvable:$true] %s44
      %47 = dma.hbm_to_vmem [thread:$0]  %s43, 32, %s45, [#allocation5]
    $region13: #{tpu_custom_call.1} parent=1 // pred_fallthru
      _
    // Predicated region
    $region14: #{tpu_custom_call.1} parent=1 // pred_check
      _
    $region15: #{tpu_custom_call.1} parent=1 // pred_check_branch
      %49 = sbr.rel (0) target = $region17
    $region16: #{tpu_custom_call.1} parent=1 // pred_region
      %51 = vsyncadd [#allocation8], 0
      %s52 = sshll.u32 %s3, 4
      %s53 = int_to_ptr.hbm [resolvable:$true] %s52
      %s54 = sshll.u32 [#allocation7], 4
      %s55 = int_to_ptr.vmem [resolvable:$true] %s54
      %60 = dma.hbm_to_vmem [thread:$0]  %s53, 2048, %s55, [#allocation8], 64, 64, 4
    $region17: #{tpu_custom_call.1} parent=1 // pred_fallthru
      _
    // Predicated region
    $region18: #{tpu_custom_call.1} parent=1 // pred_check
      _
    $region19: #{tpu_custom_call.1} parent=1 // pred_check_branch
      %62 = sbr.rel (0) target = $region21
    $region20: #{tpu_custom_call.1} parent=1 // pred_region
      _
    $region21: #{tpu_custom_call.1} parent=1 // pred_fallthru
      _
    // Predicated region
    $region22: #{tpu_custom_call.1} parent=1 // pred_check
      _
    $region23: #{tpu_custom_call.1} parent=1 // pred_check_branch
      %64 = sbr.rel (0) target = $region25
    $region24: #{tpu_custom_call.1} parent=1 // pred_region
      %66 = dma.done [#allocation3], 256
    $region25: #{tpu_custom_call.1} parent=1 // pred_fallthru
      _
    // Predicated region
    $region26: #{tpu_custom_call.1} parent=1 // pred_check
      _
    $region27: #{tpu_custom_call.1} parent=1 // pred_check_branch
      %68 = sbr.rel (0) target = $region29
    $region28: #{tpu_custom_call.1} parent=1 // pred_region
      %70 = dma.done [#allocation5], 3200
    $region29: #{tpu_custom_call.1} parent=1 // pred_fallthru
      _
    // Predicated region
    $region30: #{tpu_custom_call.1} parent=1 // pred_check
      _
    $region31: #{tpu_custom_call.1} parent=1 // pred_check_branch
      %72 = sbr.rel (0) target = $region33
    $region32: #{tpu_custom_call.1} parent=1 // pred_region
      %74 = dma.done [#allocation5], 32
    $region33: #{tpu_custom_call.1} parent=1 // pred_fallthru
      _
    // Predicated region
    $region34: #{tpu_custom_call.1} parent=1 // pred_check
      _
    $region35: #{tpu_custom_call.1} parent=1 // pred_check_branch
      %76 = sbr.rel (0) target = $region37
    $region36: #{tpu_custom_call.1} parent=1 // pred_region
      %78 = dma.done [#allocation8], 2048
    $region37: #{tpu_custom_call.1} parent=1 // pred_fallthru
      _
    %v80 = vld [vmem:[#allocation2] sm:$0xff]
    %v81 = vld [vmem:[#allocation2 + $0x8] sm:$0xff]
    %v82 = vpack.c.bf16 %v80, %v80
    %v83 = vpack.c.bf16 %v81, %v81
    %v84 = vld [vmem:[#allocation4] sm:$0xff]
    %v85 = vld [vmem:[#allocation4 + $0x8] sm:$0xff]
    %v86 = vld [vmem:[#allocation4 + $0x10] sm:$0xff]
    %v87 = vld [vmem:[#allocation4 + $0x18] sm:$0xff]
    %v88 = vld [vmem:[#allocation4 + $0x20] sm:$0xff]
    %v89 = vld [vmem:[#allocation4 + $0x28] sm:$0xff]
    %v90 = vld [vmem:[#allocation4 + $0x30] sm:$0xff]
    %v91 = vld [vmem:[#allocation4 + $0x38] sm:$0xff]
    %v92 = vld [vmem:[#allocation4 + $0x40] sm:$0xff]
    %v93 = vld [vmem:[#allocation4 + $0x48] sm:$0xff]
    %v94 = vld [vmem:[#allocation4 + $0x50] sm:$0xff]
    %v95 = vld [vmem:[#allocation4 + $0x58] sm:$0xff]
    %v96 = vld [vmem:[#allocation4 + $0x60] sm:$0xff]
    %v97 = vld [vmem:[#allocation4 + $0x68] sm:$0xff]
    %v98 = vld [vmem:[#allocation4 + $0x70] sm:$0xff]
    %v99 = vld [vmem:[#allocation4 + $0x78] sm:$0xff]
    %v100 = vld [vmem:[#allocation4 + $0x80] sm:$0xff]
    %v101 = vld [vmem:[#allocation4 + $0x88] sm:$0xff]
    %v102 = vld [vmem:[#allocation4 + $0x90] sm:$0xff]
    %v103 = vld [vmem:[#allocation4 + $0x98] sm:$0xff]
    %v104 = vld [vmem:[#allocation4 + $0xa0] sm:$0xff]
    %v105 = vld [vmem:[#allocation4 + $0xa8] sm:$0xff]
    %v106 = vld [vmem:[#allocation4 + $0xb0] sm:$0xff]
    %v107 = vld [vmem:[#allocation4 + $0xb8] sm:$0xff]
    %v108 = vld [vmem:[#allocation4 + $0xc0] sm:$0xff]
    %v109 = vld [vmem:[#allocation6] sm:$0x3]
    %v111 = vperm.slane %v109, 0
    %v112 = vperm.slane %v109, 1
    %v140 = vunpack.c.l.b16 %v84
    %v141 = vunpack.c.h.b16 %v84
    %v142 = vunpack.c.l.b16 %v85
    %v143 = vunpack.c.h.b16 %v85
    %v144 = vunpack.c.l.b16 %v86
    %v145 = vunpack.c.h.b16 %v86
    %v146 = vunpack.c.l.b16 %v87
    %v147 = vunpack.c.h.b16 %v87
    %v148 = vunpack.c.l.b16 %v88
    %v149 = vunpack.c.h.b16 %v88
    %v150 = vunpack.c.l.b16 %v89
    %v151 = vunpack.c.h.b16 %v89
    %v152 = vunpack.c.l.b16 %v90
    %v153 = vunpack.c.h.b16 %v90
    %v154 = vunpack.c.l.b16 %v91
    %v155 = vunpack.c.h.b16 %v91
    %v156 = vunpack.c.l.b16 %v92
    %v157 = vunpack.c.h.b16 %v92
    %v158 = vunpack.c.l.b16 %v93
    %v159 = vunpack.c.h.b16 %v93
    %v160 = vunpack.c.l.b16 %v94
    %v161 = vunpack.c.h.b16 %v94
    %v162 = vunpack.c.l.b16 %v95
    %v163 = vunpack.c.h.b16 %v95
    %v164 = vunpack.c.l.b16 %v96
    %v165 = vunpack.c.h.b16 %v96
    %v166 = vunpack.c.l.b16 %v97
    %v167 = vunpack.c.h.b16 %v97
    %v168 = vunpack.c.l.b16 %v98
    %v169 = vunpack.c.h.b16 %v98
    %v170 = vunpack.c.l.b16 %v99
    %v171 = vunpack.c.h.b16 %v99
    %v172 = vunpack.c.l.b16 %v100
    %v173 = vunpack.c.h.b16 %v100
    %v174 = vunpack.c.l.b16 %v101
    %v175 = vunpack.c.h.b16 %v101
    %v176 = vunpack.c.l.b16 %v102
    %v177 = vunpack.c.h.b16 %v102
    %v178 = vunpack.c.l.b16 %v103
    %v179 = vunpack.c.h.b16 %v103
    %v180 = vunpack.c.l.b16 %v104
    %v181 = vunpack.c.h.b16 %v104
    %v182 = vunpack.c.l.b16 %v105
    %v183 = vunpack.c.h.b16 %v105
    %v184 = vunpack.c.l.b16 %v106
    %v185 = vunpack.c.h.b16 %v106
    %v186 = vunpack.c.l.b16 %v107
    %v187 = vunpack.c.h.b16 %v107
    %v188 = vunpack.c.l.b16 %v108
    %v189 = vunpack.c.h.b16 %v108
    %v190 = vpack.c.b16 %v142, %v140
    %v191 = vpack.c.b16 %v143, %v141
    %v192 = vpack.c.b16 %v146, %v144
    %v193 = vpack.c.b16 %v147, %v145
    %v194 = vpack.c.b16 %v150, %v148
    %v195 = vpack.c.b16 %v151, %v149
    %v196 = vpack.c.b16 %v154, %v152
    %v197 = vpack.c.b16 %v155, %v153
    %v198 = vpack.c.b16 %v158, %v156
    %v199 = vpack.c.b16 %v159, %v157
    %v200 = vpack.c.b16 %v162, %v160
    %v201 = vpack.c.b16 %v163, %v161
    %v202 = vpack.c.b16 %v166, %v164
    %v203 = vpack.c.b16 %v167, %v165
    %v204 = vpack.c.b16 %v170, %v168
    %v205 = vpack.c.b16 %v171, %v169
    %v206 = vpack.c.b16 %v174, %v172
    %v207 = vpack.c.b16 %v175, %v173
    %v208 = vpack.c.b16 %v178, %v176
    %v209 = vpack.c.b16 %v179, %v177
    %v210 = vpack.c.b16 %v182, %v180
    %v211 = vpack.c.b16 %v183, %v181
    %v212 = vpack.c.b16 %v186, %v184
    %v213 = vpack.c.b16 %v187, %v185
    %v214 = vpack.c.b16 %v188, %v188
    %v215 = vpack.c.b16 %v189, %v189
    %vm240 = vcmask 588800
    %v242 = vsel %vm240, %v83, 0
    %vm244 = vcmask 1043456
    %v246 = vsel %vm244, %v214, 0
    %v249 = vsel %vm244, %v215, 0
    %251 = vmatpush.bf16.msra.mxu0 %v204
    %252 = vmatpush.bf16.msra.mxu0 %v202
    %253 = vmatpush.bf16.msra.mxu0 %v200
    %254 = vmatpush.bf16.msra.mxu0 %v198
    %255 = vmatpush.bf16.msra.mxu0 %v196
    %256 = vmatpush.bf16.msra.mxu0 %v194
    %257 = vmatpush.bf16.msra.mxu0 %v192
    %258 = vmatpush.bf16.msra.mxu0 %v190
    %259 = vmatmul.bf16.gmra.mxu0 %v82
    %v260 = vpop.f32.mrf.mxu0
    %v261 = vadd.f32 %v111, %v260
    %v262 = vpop.f32.mrf.mxu0
    %263 = vdwg.mxu0
    %264 = vmatpush.bf16.msra.mxu0 0
    %265 = vmatpush.bf16.msra.mxu0 0
    %266 = vmatpush.bf16.msra.mxu0 0
    %267 = vmatpush.bf16.msra.mxu0 %v246
    %268 = vmatpush.bf16.msra.mxu0 %v212
    %269 = vmatpush.bf16.msra.mxu0 %v210
    %270 = vmatpush.bf16.msra.mxu0 %v208
    %271 = vmatpush.bf16.msra.mxu0 %v206
    %272 = vmatmul.bf16.gmra.mxu0 %v242
    %v273 = vpop.f32.mrf.mxu0
    %v274 = vadd.f32 %v261, %v273
    %v275 = vpop.f32.mrf.mxu0
    %276 = vdwg.mxu0
    %277 = vmatpush.bf16.msra.mxu0 %v205
    %278 = vmatpush.bf16.msra.mxu0 %v203
    %279 = vmatpush.bf16.msra.mxu0 %v201
    %280 = vmatpush.bf16.msra.mxu0 %v199
    %281 = vmatpush.bf16.msra.mxu0 %v197
    %282 = vmatpush.bf16.msra.mxu0 %v195
    %283 = vmatpush.bf16.msra.mxu0 %v193
    %284 = vmatpush.bf16.msra.mxu0 %v191
    %285 = vmatmul.bf16.gmra.mxu0 %v82
    %v286 = vpop.f32.mrf.mxu0
    %v287 = vadd.f32 %v112, %v286
    %v288 = vpop.f32.mrf.mxu0
    %289 = vdwg.mxu0
    %290 = vmatpush.bf16.msra.mxu0 0
    %291 = vmatpush.bf16.msra.mxu0 0
    %292 = vmatpush.bf16.msra.mxu0 0
    %293 = vmatpush.bf16.msra.mxu0 %v249
    %294 = vmatpush.bf16.msra.mxu0 %v213
    %295 = vmatpush.bf16.msra.mxu0 %v211
    %296 = vmatpush.bf16.msra.mxu0 %v209
    %297 = vmatpush.bf16.msra.mxu0 %v207
    %298 = vmatmul.bf16.gmra.mxu0 %v242
    %v299 = vpop.f32.mrf.mxu0
    %v300 = vadd.f32 %v287, %v299
    %v301 = vpop.f32.mrf.mxu0
    %302 = vdwg.mxu0
    %v303 = vmax.f32 %v274, 0.0
    %v304 = vmax.f32 %v300, 0.0
    %v305 = vpack.c.bf16 %v303, %v303
    %v306 = vpack.c.bf16 %v304, %v304
    %v307 = vld [vmem:[#allocation7] sm:$0xf]
    %v308 = vld [vmem:[#allocation7 + $0x4] sm:$0xf]
    %v309 = vld [vmem:[#allocation7 + $0x8] sm:$0xf]
    %v310 = vld [vmem:[#allocation7 + $0xc] sm:$0xf]
    %v311 = vld [vmem:[#allocation7 + $0x10] sm:$0xf]
    %v312 = vld [vmem:[#allocation7 + $0x14] sm:$0xf]
    %v313 = vld [vmem:[#allocation7 + $0x18] sm:$0xf]
    %v314 = vld [vmem:[#allocation7 + $0x1c] sm:$0xf]
    %v315 = vld [vmem:[#allocation7 + $0x20] sm:$0xf]
    %v316 = vld [vmem:[#allocation7 + $0x24] sm:$0xf]
    %v317 = vld [vmem:[#allocation7 + $0x28] sm:$0xf]
    %v318 = vld [vmem:[#allocation7 + $0x2c] sm:$0xf]
    %v319 = vld [vmem:[#allocation7 + $0x30] sm:$0xf]
    %v320 = vld [vmem:[#allocation7 + $0x34] sm:$0xf]
    %v321 = vld [vmem:[#allocation7 + $0x38] sm:$0xf]
    %v322 = vld [vmem:[#allocation7 + $0x3c] sm:$0xf]
    %v323 = vld [vmem:[#allocation7 + $0x40] sm:$0xf]
    %v324 = vld [vmem:[#allocation7 + $0x44] sm:$0xf]
    %v325 = vld [vmem:[#allocation7 + $0x48] sm:$0xf]
    %v326 = vld [vmem:[#allocation7 + $0x4c] sm:$0xf]
    %v327 = vld [vmem:[#allocation7 + $0x50] sm:$0xf]
    %v328 = vld [vmem:[#allocation7 + $0x54] sm:$0xf]
    %v329 = vld [vmem:[#allocation7 + $0x58] sm:$0xf]
    %v330 = vld [vmem:[#allocation7 + $0x5c] sm:$0xf]
    %v331 = vld [vmem:[#allocation7 + $0x60] sm:$0xf]
    %v332 = vld [vmem:[#allocation7 + $0x64] sm:$0xf]
    %v333 = vld [vmem:[#allocation7 + $0x68] sm:$0xf]
    %v334 = vld [vmem:[#allocation7 + $0x6c] sm:$0xf]
    %v335 = vld [vmem:[#allocation7 + $0x70] sm:$0xf]
    %v336 = vld [vmem:[#allocation7 + $0x74] sm:$0xf]
    %v337 = vld [vmem:[#allocation7 + $0x78] sm:$0xf]
    %v338 = vld [vmem:[#allocation7 + $0x7c] sm:$0xf]
    %v371 = vunpack.c.l.b16 %v307
    %v372 = vunpack.c.l.b16 %v308
    %v373 = vunpack.c.l.b16 %v309
    %v374 = vunpack.c.l.b16 %v310
    %v375 = vunpack.c.l.b16 %v311
    %v376 = vunpack.c.l.b16 %v312
    %v377 = vunpack.c.l.b16 %v313
    %v378 = vunpack.c.l.b16 %v314
    %v379 = vunpack.c.l.b16 %v315
    %v380 = vunpack.c.l.b16 %v316
    %v381 = vunpack.c.l.b16 %v317
    %v382 = vunpack.c.l.b16 %v318
    %v383 = vunpack.c.l.b16 %v319
    %v384 = vunpack.c.l.b16 %v320
    %v385 = vunpack.c.l.b16 %v321
    %v386 = vunpack.c.l.b16 %v322
    %v387 = vunpack.c.l.b16 %v323
    %v388 = vunpack.c.l.b16 %v324
    %v389 = vunpack.c.l.b16 %v325
    %v390 = vunpack.c.l.b16 %v326
    %v391 = vunpack.c.l.b16 %v327
    %v392 = vunpack.c.l.b16 %v328
    %v393 = vunpack.c.l.b16 %v329
    %v394 = vunpack.c.l.b16 %v330
    %v395 = vunpack.c.l.b16 %v331
    %v396 = vunpack.c.l.b16 %v332
    %v397 = vunpack.c.l.b16 %v333
    %v398 = vunpack.c.l.b16 %v334
    %v399 = vunpack.c.l.b16 %v335
    %v400 = vunpack.c.l.b16 %v336
    %v401 = vunpack.c.l.b16 %v337
    %v402 = vunpack.c.l.b16 %v338
    %v403 = vpack.c.b16 %v372, %v371
    %v404 = vpack.c.b16 %v374, %v373
    %v405 = vpack.c.b16 %v376, %v375
    %v406 = vpack.c.b16 %v378, %v377
    %v407 = vpack.c.b16 %v380, %v379
    %v408 = vpack.c.b16 %v382, %v381
    %v409 = vpack.c.b16 %v384, %v383
    %v410 = vpack.c.b16 %v386, %v385
    %v411 = vpack.c.b16 %v388, %v387
    %v412 = vpack.c.b16 %v390, %v389
    %v413 = vpack.c.b16 %v392, %v391
    %v414 = vpack.c.b16 %v394, %v393
    %v415 = vpack.c.b16 %v396, %v395
    %v416 = vpack.c.b16 %v398, %v397
    %v417 = vpack.c.b16 %v400, %v399
    %v418 = vpack.c.b16 %v402, %v401
    %435 = vmatpush.bf16.msra.mxu0 %v410
    %436 = vmatpush.bf16.msra.mxu0 %v409
    %437 = vmatpush.bf16.msra.mxu0 %v408
    %438 = vmatpush.bf16.msra.mxu0 %v407
    %439 = vmatpush.bf16.msra.mxu0 %v406
    %440 = vmatpush.bf16.msra.mxu0 %v405
    %441 = vmatpush.bf16.msra.mxu0 %v404
    %442 = vmatpush.bf16.msra.mxu0 %v403
    %443 = vmatmul.bf16.gmra.mxu0 %v305
    %v444 = vpop.f32.mrf.mxu0
    %v445 = vadd.f32 0.0, %v444
    %v446 = vpop.f32.mrf.mxu0
    %447 = vdwg.mxu0
    %448 = vmatpush.bf16.msra.mxu0 %v418
    %449 = vmatpush.bf16.msra.mxu0 %v417
    %450 = vmatpush.bf16.msra.mxu0 %v416
    %451 = vmatpush.bf16.msra.mxu0 %v415
    %452 = vmatpush.bf16.msra.mxu0 %v414
    %453 = vmatpush.bf16.msra.mxu0 %v413
    %454 = vmatpush.bf16.msra.mxu0 %v412
    %455 = vmatpush.bf16.msra.mxu0 %v411
    %456 = vmatmul.bf16.gmra.mxu0 %v306
    %v457 = vpop.f32.mrf.mxu0
    %v458 = vadd.f32 %v445, %v457
    %v459 = vpop.f32.mrf.mxu0
    %460 = vdwg.mxu0
    %v461 = vld [vmem:[%s4] sm:$0x1]
    %v463 = vperm.slane %v461, 0
    %v465 = vadd.f32 %v458, %v463
    %vm466 = vcmask 31744
    %467 = vst.msk [vmem:[%s5] sm:$0xff] %vm466, %v465
    // Predicated region
    $region38: #{tpu_custom_call.1} parent=1 // pred_check
      _
    $region39: #{tpu_custom_call.1} parent=1 // pred_check_branch
      %469 = sbr.rel (0) target = $region41
    $region40: #{tpu_custom_call.1} parent=1 // pred_region
      _
    $region41: #{tpu_custom_call.1} parent=1 // pred_fallthru
      _
    // Predicated region
    $region42: #{tpu_custom_call.1} parent=1 // pred_check
      _
    $region43: #{tpu_custom_call.1} parent=1 // pred_check_branch
      %471 = sbr.rel (0) target = $region45
    $region44: #{tpu_custom_call.1} parent=1 // pred_region
      _
    $region45: #{tpu_custom_call.1} parent=1 // pred_fallthru
      _
    %472 = vsyncpa [#allocation3], 1
    %473 = vsyncpa [#allocation5], 1
    %474 = vsyncpa [#allocation8], 1

</llo_original>
